<compile_context>
chip_gen: v7x
topology: tpu7x:2x2x1
jax: 0.10.0
libtpu: 0.0.40
codegen_flags: <defaults>
</compile_context>

<pallas_src>
import jax
import jax.numpy as jnp
from jax.experimental import pallas as pl
from jax.experimental.pallas import tpu as pltpu


def soft_dot_attention_kernel(h_ref, ctx_ref, mask_ref,
                              w_in_t_ref, w_out_c_t_ref, w_out_h_t_ref,
                              h_tilde_ref, attn_ref):
    h = h_ref[...]            # (TB, D)     compute dtype
    ctx = ctx_ref[...]        # (TB, S, D)  compute dtype
    mask = mask_ref[...]      # (TB, 1, S)  f32, 1 = keep / 0 = masked
    TB, D = h.shape

    # linear_in, batched over the whole batch tile: one (TB,D)x(D,D) MXU dot.
    target = jnp.dot(h, w_in_t_ref[...],
                     preferred_element_type=jnp.float32)               # (TB, D) f32

    # logits[b, 0, s] = <context[b, s, :], target[b, :]>
    # Batched q@k.T pattern: contraction over the last dim of context, no
    # explicit transpose is ever materialized.
    target3 = target.astype(ctx.dtype).reshape(TB, 1, D)               # (TB, 1, D)
    logits = jnp.einsum('bqd,bsd->bqs', target3, ctx,
                        preferred_element_type=jnp.float32)            # (TB, 1, S)

    # Softmax over S.  Mask AFTER the exp: keeps all arithmetic finite and
    # avoids the -inf - -inf -> NaN of the masked_fill formulation.
    m = jnp.max(logits, axis=2, keepdims=True)                         # (TB, 1, 1)
    e = jnp.exp(logits - m)
    e = jnp.where(mask > 0.5, e, 0.0)                                  # (TB, 1, S)
    denom = jnp.sum(e, axis=2, keepdims=True)                          # (TB, 1, 1)
    inv = pl.reciprocal(denom, approx=True)                            # EUP slot

    # Whole-block, lane-dense store of the attention weights.
    attn_ref[...] = (e * inv).astype(attn_ref.dtype)

    # weighted_context: contract the unnormalized exp over S, then scale the
    # (TB,1,D) result once by the reciprocal (cheaper than touching (TB,S)).
    wc3 = jnp.einsum('bqs,bsd->bqd', e.astype(ctx.dtype), ctx,
                     preferred_element_type=jnp.float32)               # (TB, 1, D)
    wc = (wc3 * inv).reshape(TB, D)                                    # (TB, D) f32

    # h_tilde = tanh(linear_out(cat(wc, h))): concat split into two batched
    # (TB,D)x(D,D) MXU dots, one tanh, one whole-block store.
    out = jnp.tanh(
        jnp.dot(wc.astype(w_out_c_t_ref.dtype), w_out_c_t_ref[...],
                preferred_element_type=jnp.float32)
        + jnp.dot(h, w_out_h_t_ref[...],
                  preferred_element_type=jnp.float32))
    h_tilde_ref[...] = out.astype(h_tilde_ref.dtype)


def soft_dot_attention(h, context, mask, w_in, w_out, *,
                       compute_dtype=None, block_b=None):
    """h: (B, D); context: (B, S, D); mask: (B, S) with 1 = keep / 0 = masked;
    w_in: (D, D) PyTorch (out, in) layout; w_out: (D, 2D) PyTorch layout.
    compute_dtype=jnp.bfloat16 enables the bf16 MXU fast path (v6e/v7x)."""
    B, D = h.shape
    S = context.shape[1]

    if compute_dtype is not None:
        h = h.astype(compute_dtype)
        context = context.astype(compute_dtype)
        w_in = w_in.astype(compute_dtype)
        w_out = w_out.astype(compute_dtype)

    # Mask stays f32; shaped (B, 1, S) so the kernel needs no relayout.
    mask3 = mask.astype(jnp.float32).reshape(B, 1, S)

    # One-time host-side weight prep (tiny XLA ops, outside the hot kernel):
    # transpose to (in, out) so the kernel computes x @ W_t, and split W_out
    # so the concat becomes two dots.
    w_in_t = jnp.transpose(w_in)              # (D, D)
    w_out_c_t = jnp.transpose(w_out[:, :D])   # (D, D), acts on weighted_context
    w_out_h_t = jnp.transpose(w_out[:, D:])   # (D, D), acts on h

    # Batch tile: full batch if it is not a multiple of 8 (keeps the sublane
    # constraint trivially satisfied); otherwise 8 rows per grid step.
    if block_b is None:
        block_b = B if (B % 8 != 0) else min(B, 8)
    n_b = pl.cdiv(B, block_b)

    # VMEM budget: double-buffered tiles + resident weights, with headroom,
    # capped at 32 MiB (below v7x's 64 MiB physical / scoped default).
    itm = jnp.dtype(context.dtype).itemsize
    tile_bytes = (block_b * S * D * itm        # context tile
                  + block_b * D * itm          # h tile
                  + block_b * S * 4            # mask tile
                  + block_b * (D + S) * 4)     # output tiles
    weight_bytes = 3 * D * D * itm
    vmem_limit = int(min(max(4 * (2 * tile_bytes + weight_bytes), 8 << 20),
                         32 << 20))

    h_tilde, attn3 = pl.pallas_call(
        soft_dot_attention_kernel,
        out_shape=(
            jax.ShapeDtypeStruct((B, D), jnp.float32),
            jax.ShapeDtypeStruct((B, 1, S), jnp.float32),
        ),
        grid=(n_b,),
        in_specs=[
            pl.BlockSpec((block_b, D), lambda b: (b, 0)),          # h
            pl.BlockSpec((block_b, S, D), lambda b: (b, 0, 0)),    # context
            pl.BlockSpec((block_b, 1, S), lambda b: (b, 0, 0)),    # mask
            pl.BlockSpec((D, D), lambda b: (0, 0)),                # w_in_t
            pl.BlockSpec((D, D), lambda b: (0, 0)),                # w_out_c_t
            pl.BlockSpec((D, D), lambda b: (0, 0)),                # w_out_h_t
        ],
        out_specs=(
            pl.BlockSpec((block_b, D), lambda b: (b, 0)),          # h_tilde
            pl.BlockSpec((block_b, 1, S), lambda b: (b, 0, 0)),    # attn
        ),
        compiler_params=pltpu.CompilerParams(
            dimension_semantics=("parallel",),
            vmem_limit_bytes=vmem_limit),
    )(h, context, mask3, w_in_t, w_out_c_t, w_out_h_t)
    return h_tilde, attn3.reshape(B, S)


def soft_dot_attention_ref(h, context, mask, w_in, w_out):
    """Pure-JAX reference mirroring the PyTorch forward."""
    target = h @ w_in.T
    logits = jnp.einsum('bsd,bd->bs', context, target)
    logits = jnp.where(mask > 0.5, logits, -jnp.inf)
    p = jax.nn.softmax(logits, axis=1)
    wc = jnp.einsum('bs,bsd->bd', p, context)
    h_tilde = jnp.tanh(jnp.concatenate([wc, h], axis=1) @ w_out.T)
    return h_tilde, p


def _run_case(B, S, D, *, test_bf16=False):
    key = jax.random.PRNGKey(0)
    k_h, k_ctx, k_win, k_wout, k_len = jax.random.split(key, 5)

    h = jax.random.normal(k_h, (B, D), dtype=jnp.float32)
    context = jax.random.normal(k_ctx, (B, S, D), dtype=jnp.float32)

    # mask: 1 = valid, 0 = padded (-inf logit); at least one valid per row.
    lengths = jax.random.randint(k_len, (B,), 1, S + 1)
    mask = (jnp.arange(S)[None, :] < lengths[:, None]).astype(jnp.float32)

    # Deterministic nn.Linear-style init: U(-1/sqrt(fan_in), 1/sqrt(fan_in)).
    bound_in = 1.0 / (D ** 0.5)
    bound_out = 1.0 / ((2 * D) ** 0.5)
    w_in = jax.random.uniform(k_win, (D, D), jnp.float32, -bound_in, bound_in)
    w_out = jax.random.uniform(k_wout, (D, 2 * D), jnp.float32,
                               -bound_out, bound_out)

    h_tilde, attn = soft_dot_attention(h, context, mask, w_in, w_out)
    jax.block_until_ready((h_tilde, attn))
    h_tilde_r, attn_r = soft_dot_attention_ref(h, context, mask, w_in, w_out)
    # approx reciprocal on the EUP -> slightly relaxed tolerance vs exact f32.
    assert jnp.allclose(h_tilde, h_tilde_r, atol=2e-3, rtol=2e-3), "h_tilde (f32)"
    assert jnp.allclose(attn, attn_r, atol=2e-3, rtol=2e-3), "attn (f32)"

    if test_bf16:
        # bf16 fast-path smoke test (v6e/v7x native MXU input type); compared
        # against a reference running on bf16-rounded inputs, loose tolerance.
        h_tb, attn_b = soft_dot_attention(h, context, mask, w_in, w_out,
                                          compute_dtype=jnp.bfloat16)
        jax.block_until_ready((h_tb, attn_b))
        f32 = jnp.float32
        h_tr, attn_br = soft_dot_attention_ref(
            h.astype(jnp.bfloat16).astype(f32),
            context.astype(jnp.bfloat16).astype(f32),
            mask,
            w_in.astype(jnp.bfloat16).astype(f32),
            w_out.astype(jnp.bfloat16).astype(f32))
        assert jnp.allclose(h_tb, h_tr, atol=5e-2, rtol=5e-2), "h_tilde (bf16)"
        assert jnp.allclose(attn_b, attn_br, atol=5e-2, rtol=5e-2), "attn (bf16)"


if __name__ == "__main__":
    # Small shapes consistent with the module: batch=2, seq=8, hidden=32.
    _run_case(B=2, S=8, D=32, test_bf16=True)
    # Exercise a multi-step batch grid (2 grid steps of 8 rows each).
    _run_case(B=16, S=8, D=32)
    print("KERNEL_OK")
</pallas_src>

<mosaic_0001>
module attributes {stable_mosaic.version = 11 : i64} {
  func.func @soft_dot_attention_kernel(%arg0: i32, %arg1: memref<2x32xf32, #tpu.memory_space<vmem>>, %arg2: memref<2x8x32xf32, #tpu.memory_space<vmem>>, %arg3: memref<2x1x8xf32, #tpu.memory_space<vmem>>, %arg4: memref<32x32xf32, #tpu.memory_space<vmem>>, %arg5: memref<32x32xf32, #tpu.memory_space<vmem>>, %arg6: memref<32x32xf32, #tpu.memory_space<vmem>>, %arg7: memref<2x32xf32, #tpu.memory_space<vmem>>, %arg8: memref<2x1x8xf32, #tpu.memory_space<vmem>>) attributes {dimension_semantics = [#tpu.dimension_semantics<parallel>], iteration_bounds = array<i64: 1>, scalar_prefetch = 0 : i64, scratch_operands = 0 : i64, tpu.core_type = #tpu.core_type<tc>, window_params = [{transform_indices = @transform_0, window_bounds = array<i64: 2, 32>}, {transform_indices = @transform_1, window_bounds = array<i64: 2, 8, 32>}, {transform_indices = @transform_2, window_bounds = array<i64: 2, 1, 8>}, {pipeline_mode = #tpu.pipeline_mode<synchronous>, transform_indices = @transform_3, window_bounds = array<i64: 32, 32>}, {pipeline_mode = #tpu.pipeline_mode<synchronous>, transform_indices = @transform_4, window_bounds = array<i64: 32, 32>}, {pipeline_mode = #tpu.pipeline_mode<synchronous>, transform_indices = @transform_5, window_bounds = array<i64: 32, 32>}, {transform_indices = @transform_6, window_bounds = array<i64: 2, 32>}, {transform_indices = @transform_7, window_bounds = array<i64: 2, 1, 8>}]} {
    %c0 = arith.constant 0 : index
    %c0_0 = arith.constant 0 : index
    %0 = vector.load %arg1[%c0, %c0_0] : memref<2x32xf32, #tpu.memory_space<vmem>>, vector<2x32xf32>
    %c0_1 = arith.constant 0 : index
    %c0_2 = arith.constant 0 : index
    %c0_3 = arith.constant 0 : index
    %1 = vector.load %arg2[%c0_1, %c0_2, %c0_3] : memref<2x8x32xf32, #tpu.memory_space<vmem>>, vector<2x8x32xf32>
    %c0_4 = arith.constant 0 : index
    %c0_5 = arith.constant 0 : index
    %c0_6 = arith.constant 0 : index
    %2 = vector.load %arg3[%c0_4, %c0_5, %c0_6] : memref<2x1x8xf32, #tpu.memory_space<vmem>>, vector<2x1x8xf32>
    %c0_7 = arith.constant 0 : index
    %c0_8 = arith.constant 0 : index
    %3 = vector.load %arg4[%c0_7, %c0_8] : memref<32x32xf32, #tpu.memory_space<vmem>>, vector<32x32xf32>
    %cst = arith.constant dense<0.000000e+00> : vector<2x32xf32>
    %4 = tpu.matmul %0, %3, %cst {dimension_numbers = #tpu.dot_dimension_numbers<[1], [0], [0], [1], [0, 0, 1, 1], [], []>} : vector<2x32xf32>, vector<32x32xf32>, vector<2x32xf32> -> vector<2x32xf32>
    %5 = vector.shape_cast %4 : vector<2x32xf32> to vector<2x1x32xf32>
    "tpu.trace_start"() <{level = 10 : i32, message = "bqd,bsd->bqs"}> : () -> ()
    %cst_9 = arith.constant dense<0.000000e+00> : vector<2x1x8xf32>
    %6 = tpu.matmul %5, %1, %cst_9 {dimension_numbers = #tpu.dot_dimension_numbers<[2], [2], [1], [1], [0, 0, 0, 1, 1, 1], [0], [0]>} : vector<2x1x32xf32>, vector<2x8x32xf32>, vector<2x1x8xf32> -> vector<2x1x8xf32>
    "tpu.trace_stop"() : () -> ()
    %cst_10 = arith.constant dense<0xFF800000> : vector<2x1xf32>
    %7 = vector.multi_reduction <maximumf>, %6, %cst_10 [2] : vector<2x1x8xf32> to vector<2x1xf32>
    %8 = vector.shape_cast %7 : vector<2x1xf32> to vector<2x1x1xf32>
    %9 = vector.broadcast %8 : vector<2x1x1xf32> to vector<2x1x8xf32>
    %10 = arith.subf %6, %9 : vector<2x1x8xf32>
    %11 = math.exp %10 : vector<2x1x8xf32>
    %cst_11 = arith.constant 5.000000e-01 : f32
    %12 = vector.broadcast %cst_11 : f32 to vector<2x1x8xf32>
    %13 = arith.cmpf ogt, %2, %12 : vector<2x1x8xf32>
    %cst_12 = arith.constant 0.000000e+00 : f32
    %14 = vector.broadcast %cst_12 : f32 to vector<2x1x8xf32>
    %15 = arith.select %13, %11, %14 : vector<2x1x8xi1>, vector<2x1x8xf32>
    %cst_13 = arith.constant dense<0.000000e+00> : vector<2x1xf32>
    %16 = vector.multi_reduction <add>, %15, %cst_13 [2] : vector<2x1x8xf32> to vector<2x1xf32>
    %17 = vector.shape_cast %16 : vector<2x1xf32> to vector<2x1x1xf32>
    %18 = tpu.reciprocal %17 {approx = true} : vector<2x1x1xf32> -> vector<2x1x1xf32>
    %19 = vector.broadcast %18 : vector<2x1x1xf32> to vector<2x1x8xf32>
    %20 = arith.mulf %15, %19 : vector<2x1x8xf32>
    %c0_14 = arith.constant 0 : index
    %c0_15 = arith.constant 0 : index
    %c0_16 = arith.constant 0 : index
    %21 = vector.load %arg8[%c0_14, %c0_15, %c0_16] : memref<2x1x8xf32, #tpu.memory_space<vmem>>, vector<2x1x8xf32>
    tpu.vector_store %arg8[%c0_14, %c0_15, %c0_16], %20 {strides = array<i32>} : memref<2x1x8xf32, #tpu.memory_space<vmem>>, vector<2x1x8xf32>,
    "tpu.trace_start"() <{level = 10 : i32, message = "bqs,bsd->bqd"}> : () -> ()
    %cst_17 = arith.constant dense<0.000000e+00> : vector<2x1x32xf32>
    %22 = tpu.matmul %15, %1, %cst_17 {dimension_numbers = #tpu.dot_dimension_numbers<[2], [1], [1], [2], [0, 0, 0, 1, 1, 2], [0], [0]>} : vector<2x1x8xf32>, vector<2x8x32xf32>, vector<2x1x32xf32> -> vector<2x1x32xf32>
    "tpu.trace_stop"() : () -> ()
    %23 = vector.broadcast %18 : vector<2x1x1xf32> to vector<2x1x32xf32>
    %24 = arith.mulf %22, %23 : vector<2x1x32xf32>
    %25 = vector.shape_cast %24 : vector<2x1x32xf32> to vector<2x32xf32>
    %c0_18 = arith.constant 0 : index
    %c0_19 = arith.constant 0 : index
    %26 = vector.load %arg5[%c0_18, %c0_19] : memref<32x32xf32, #tpu.memory_space<vmem>>, vector<32x32xf32>
    %cst_20 = arith.constant dense<0.000000e+00> : vector<2x32xf32>
    %27 = tpu.matmul %25, %26, %cst_20 {dimension_numbers = #tpu.dot_dimension_numbers<[1], [0], [0], [1], [0, 0, 1, 1], [], []>} : vector<2x32xf32>, vector<32x32xf32>, vector<2x32xf32> -> vector<2x32xf32>
    %c0_21 = arith.constant 0 : index
    %c0_22 = arith.constant 0 : index
    %28 = vector.load %arg6[%c0_21, %c0_22] : memref<32x32xf32, #tpu.memory_space<vmem>>, vector<32x32xf32>
    %cst_23 = arith.constant dense<0.000000e+00> : vector<2x32xf32>
    %29 = tpu.matmul %0, %28, %cst_23 {dimension_numbers = #tpu.dot_dimension_numbers<[1], [0], [0], [1], [0, 0, 1, 1], [], []>} : vector<2x32xf32>, vector<32x32xf32>, vector<2x32xf32> -> vector<2x32xf32>
    %30 = arith.addf %27, %29 : vector<2x32xf32>
    %31 = math.tanh %30 : vector<2x32xf32>
    %c0_24 = arith.constant 0 : index
    %c0_25 = arith.constant 0 : index
    %32 = vector.load %arg7[%c0_24, %c0_25] : memref<2x32xf32, #tpu.memory_space<vmem>>, vector<2x32xf32>
    tpu.vector_store %arg7[%c0_24, %c0_25], %31 {strides = array<i32>} : memref<2x32xf32, #tpu.memory_space<vmem>>, vector<2x32xf32>,
    return
  }
  func.func @transform_0(%arg0: i32) -> (i32, i32) {
    %c0_i32 = arith.constant 0 : i32
    %c0_i32_0 = arith.constant 0 : i32
    return %arg0, %c0_i32 : i32, i32
  }
  func.func @transform_1(%arg0: i32) -> (i32, i32, i32) {
    %c0_i32 = arith.constant 0 : i32
    %c0_i32_0 = arith.constant 0 : i32
    %c0_i32_1 = arith.constant 0 : i32
    return %arg0, %c0_i32, %c0_i32_0 : i32, i32, i32
  }
  func.func @transform_2(%arg0: i32) -> (i32, i32, i32) {
    %c0_i32 = arith.constant 0 : i32
    %c0_i32_0 = arith.constant 0 : i32
    %c0_i32_1 = arith.constant 0 : i32
    return %arg0, %c0_i32, %c0_i32_0 : i32, i32, i32
  }
  func.func @transform_3(%arg0: i32) -> (i32, i32) {
    %c0_i32 = arith.constant 0 : i32
    %c0_i32_0 = arith.constant 0 : i32
    %c0_i32_1 = arith.constant 0 : i32
    return %c0_i32, %c0_i32_0 : i32, i32
  }
  func.func @transform_4(%arg0: i32) -> (i32, i32) {
    %c0_i32 = arith.constant 0 : i32
    %c0_i32_0 = arith.constant 0 : i32
    %c0_i32_1 = arith.constant 0 : i32
    return %c0_i32, %c0_i32_0 : i32, i32
  }
  func.func @transform_5(%arg0: i32) -> (i32, i32) {
    %c0_i32 = arith.constant 0 : i32
    %c0_i32_0 = arith.constant 0 : i32
    %c0_i32_1 = arith.constant 0 : i32
    return %c0_i32, %c0_i32_0 : i32, i32
  }
  func.func @transform_6(%arg0: i32) -> (i32, i32) {
    %c0_i32 = arith.constant 0 : i32
    %c0_i32_0 = arith.constant 0 : i32
    return %arg0, %c0_i32 : i32, i32
  }
  func.func @transform_7(%arg0: i32) -> (i32, i32, i32) {
    %c0_i32 = arith.constant 0 : i32
    %c0_i32_0 = arith.constant 0 : i32
    %c0_i32_1 = arith.constant 0 : i32
    return %arg0, %c0_i32, %c0_i32_0 : i32, i32, i32
  }
}

</mosaic_0001>

<llo_original>
// kernel: tpu_custom_call.1
$region0: #{tpu_custom_call.1}
  #allocation0 [shape = 'u32[]', space=smem, size = 0x4, offset = 0x4, fixed_abs, tag = 'smem constant byte address 0x4 - core index']
  #allocation1 [shape = 'u32[144,128]{1,0:T(1,128)}', space=vmem, size = 0x12000, scoped, tag = 'internal scratch']
  %s0 = inlined_call_operand.hbm [shape: f32[2,32], index: 0, kind: input, shape index: {}]
  %s1 = inlined_call_operand.hbm [shape: f32[2,8,32], index: 1, kind: input, shape index: {}]
  %s2 = inlined_call_operand.vmem [shape: f32[2,1,8], index: 2, kind: input, shape index: {}]
  %s3 = inlined_call_operand.hbm [shape: f32[32,32], index: 3, kind: input, shape index: {}]
  %s4 = inlined_call_operand.hbm [shape: f32[32,32], index: 4, kind: input, shape index: {}]
  %s5 = inlined_call_operand.hbm [shape: f32[32,32], index: 5, kind: input, shape index: {}]
  %s6 = inlined_call_operand.hbm [shape: f32[2,32], index: 6, kind: output, shape index: {0}]
  %s7 = inlined_call_operand.hbm [shape: f32[2,1,8], index: 7, kind: output, shape index: {1}]
  %8 = xla_tuple %s6, %s7
  %s9 = sld [smem:[#allocation0]]
  $region62: #{tpu_custom_call.1} parent=0
    _
  %s11 = ssub.s32 1, %s9
  %s12 = scalar_select 0, %s11, %s9
  $region1: #{tpu_custom_call.1} parent=0
    #allocation2 [shape = 'u8[1024]{0}', space=vmem, size = 0x400, scoped, tag = 'input window, operand 0, single buffered']
    #allocation3 [shape = 's32[1]{0}', space=sflag, size = 0x4, scoped, tag = 'scoped memory for tpu_custom_call.1']
    #allocation4 [shape = 's32[1]{0}', space=sflag, size = 0x4, scoped, tag = 'scoped memory for tpu_custom_call.1']
    #allocation5 [shape = 'u8[8192]{0}', space=vmem, size = 0x2000, scoped, tag = 'input window, operand 1, single buffered']
    #allocation6 [shape = 's32[1]{0}', space=sflag, size = 0x4, scoped, tag = 'scoped memory for tpu_custom_call.1']
    #allocation7 [shape = 'u8[16384]{0}', space=vmem, size = 0x4000, scoped, tag = 'input window, operand 3, single buffered']
    #allocation8 [shape = 'u8[16384]{0}', space=vmem, size = 0x4000, scoped, tag = 'input window, operand 4, single buffered']
    #allocation9 [shape = 's32[1]{0}', space=sflag, size = 0x4, scoped, tag = 'scoped memory for tpu_custom_call.1']
    #allocation10 [shape = 'u8[16384]{0}', space=vmem, size = 0x4000, scoped, tag = 'input window, operand 5, single buffered']
    #allocation11 [shape = 'u8[1024]{0}', space=vmem, size = 0x400, scoped, tag = 'output window, operand 0, single buffered']
    #allocation12 [shape = 'u8[1024]{0}', space=vmem, size = 0x400, scoped, tag = 'output window, operand 1, single buffered']
    #allocation13 [shape = 's32[1]{0}', space=sflag, size = 0x4, scoped, tag = 'scoped memory for tpu_custom_call.1']
    %13 = vsyncpa [#allocation3], 0
    %14 = vsyncpa [#allocation6], 0
    %15 = vsyncpa [#allocation9], 0
    %16 = vsyncpa [#allocation4], 0
    %17 = vsyncpa [#allocation13], 0
    // Predicated region
    $region2: #{tpu_custom_call.1} parent=1 // pred_check
      _
    $region3: #{tpu_custom_call.1} parent=1 // pred_check_branch
      %19 = sbr.rel (0) target = $region5
    $region4: #{tpu_custom_call.1} parent=1 // pred_region
      %s21 = ssub.s32 32, 32
      %22 = vsyncadd [#allocation3], %s21
      %s24 = sshll.u32 [#allocation2], 4
      %s25 = int_to_ptr.vmem [resolvable:$true] %s24
      %27 = dma.hbm_to_vmem [thread:$0]  %s0, 32, %s25, [#allocation3]
    $region5: #{tpu_custom_call.1} parent=1 // pred_fallthru
      _
    // Predicated region
    $region6: #{tpu_custom_call.1} parent=1 // pred_check
      _
    $region7: #{tpu_custom_call.1} parent=1 // pred_check_branch
      %29 = sbr.rel (0) target = $region9
    $region8: #{tpu_custom_call.1} parent=1 // pred_region
      %s31 = ssub.s32 256, 256
      %32 = vsyncadd [#allocation6], %s31
      %s33 = sshll.u32 [#allocation5], 4
      %s34 = int_to_ptr.vmem [resolvable:$true] %s33
      %39 = dma.hbm_to_vmem [thread:$0]  %s1, 256, %s34, [#allocation6], 128, 128, 8
    $region9: #{tpu_custom_call.1} parent=1 // pred_fallthru
      _
    // Predicated region
    $region10: #{tpu_custom_call.1} parent=1 // pred_check
      _
    $region11: #{tpu_custom_call.1} parent=1 // pred_check_branch
      %41 = sbr.rel (0) target = $region13
    $region12: #{tpu_custom_call.1} parent=1 // pred_region
      _
    $region13: #{tpu_custom_call.1} parent=1 // pred_fallthru
      _
    // Predicated region
    $region14: #{tpu_custom_call.1} parent=1 // pred_check
      _
    $region15: #{tpu_custom_call.1} parent=1 // pred_check_branch
      %43 = sbr.rel (0) target = $region17
    $region16: #{tpu_custom_call.1} parent=1 // pred_region
      %s45 = ssub.s32 512, 512
      %46 = vsyncadd [#allocation6], %s45
      %s47 = sshll.u32 [#allocation7], 4
      %s48 = int_to_ptr.vmem [resolvable:$true] %s47
      %53 = dma.hbm_to_vmem [thread:$0]  %s3, 512, %s48, [#allocation6], 128, 128, 8
    $region17: #{tpu_custom_call.1} parent=1 // pred_fallthru
      _
    // Predicated region
    $region18: #{tpu_custom_call.1} parent=1 // pred_check
      _
    $region19: #{tpu_custom_call.1} parent=1 // pred_check_branch
      %55 = sbr.rel (0) target = $region21
    $region20: #{tpu_custom_call.1} parent=1 // pred_region
      %s57 = ssub.s32 512, 512
      %58 = vsyncadd [#allocation9], %s57
      %s59 = sshll.u32 [#allocation8], 4
      %s60 = int_to_ptr.vmem [resolvable:$true] %s59
      %65 = dma.hbm_to_vmem [thread:$0]  %s4, 512, %s60, [#allocation9], 128, 128, 8
    $region21: #{tpu_custom_call.1} parent=1 // pred_fallthru
      _
    // Predicated region
    $region22: #{tpu_custom_call.1} parent=1 // pred_check
      _
    $region23: #{tpu_custom_call.1} parent=1 // pred_check_branch
      %67 = sbr.rel (0) target = $region25
    $region24: #{tpu_custom_call.1} parent=1 // pred_region
      %s69 = ssub.s32 512, 512
      %70 = vsyncadd [#allocation9], %s69
      %s71 = sshll.u32 [#allocation10], 4
      %s72 = int_to_ptr.vmem [resolvable:$true] %s71
      %77 = dma.hbm_to_vmem [thread:$0]  %s5, 512, %s72, [#allocation9], 128, 128, 8
    $region25: #{tpu_custom_call.1} parent=1 // pred_fallthru
      _
    // Predicated region
    $region26: #{tpu_custom_call.1} parent=1 // pred_check
      _
    $region27: #{tpu_custom_call.1} parent=1 // pred_check_branch
      %79 = sbr.rel (0) target = $region29
    $region28: #{tpu_custom_call.1} parent=1 // pred_region
      %80 = dma.done [#allocation3], 32
    $region29: #{tpu_custom_call.1} parent=1 // pred_fallthru
      _
    // Predicated region
    $region30: #{tpu_custom_call.1} parent=1 // pred_check
      _
    $region31: #{tpu_custom_call.1} parent=1 // pred_check_branch
      %82 = sbr.rel (0) target = $region33
    $region32: #{tpu_custom_call.1} parent=1 // pred_region
      %83 = dma.done [#allocation6], 256
    $region33: #{tpu_custom_call.1} parent=1 // pred_fallthru
      _
    // Predicated region
    $region34: #{tpu_custom_call.1} parent=1 // pred_check
      _
    $region35: #{tpu_custom_call.1} parent=1 // pred_check_branch
      %85 = sbr.rel (0) target = $region37
    $region36: #{tpu_custom_call.1} parent=1 // pred_region
      %86 = dma.done [#allocation6], 512
    $region37: #{tpu_custom_call.1} parent=1 // pred_fallthru
      _
    // Predicated region
    $region38: #{tpu_custom_call.1} parent=1 // pred_check
      _
    $region39: #{tpu_custom_call.1} parent=1 // pred_check_branch
      %88 = sbr.rel (0) target = $region41
    $region40: #{tpu_custom_call.1} parent=1 // pred_region
      %89 = dma.done [#allocation9], 512
    $region41: #{tpu_custom_call.1} parent=1 // pred_fallthru
      _
    // Predicated region
    $region42: #{tpu_custom_call.1} parent=1 // pred_check
      _
    $region43: #{tpu_custom_call.1} parent=1 // pred_check_branch
      %91 = sbr.rel (0) target = $region45
    $region44: #{tpu_custom_call.1} parent=1 // pred_region
      %92 = dma.done [#allocation9], 512
    $region45: #{tpu_custom_call.1} parent=1 // pred_fallthru
      _
    %v93 = vld [vmem:[#allocation2] sm:$0x3]
    %v94 = vld [vmem:[#allocation5] sm:$0xff]
    %v95 = vld [vmem:[#allocation5 + $0x8] sm:$0xff]
    %v96 = vld [vmem:[%s2] sm:$0x1]
    %v97 = vld [vmem:[%s2 + $0x1] sm:$0x1]
    %v98 = vld [vmem:[#allocation7] sm:$0xff]
    %v99 = vld [vmem:[#allocation7 + $0x8] sm:$0xff]
    %v100 = vld [vmem:[#allocation7 + $0x10] sm:$0xff]
    %v101 = vld [vmem:[#allocation7 + $0x18] sm:$0xff]
    %vm102 = vcmask 261120
    %v104 = vsel %vm102, %v93, 0
    %106 = vmatprep.subr.mxu0 0.0
    %107 = vmatpush1.msra.mxu0 %v98
    %108 = vmatprep.subr.mxu0 0.0
    %109 = vmatpush1.msra.mxu0 %v99
    %110 = vmatprep.subr.mxu0 0.0
    %111 = vmatpush1.msra.mxu0 %v100
    %112 = vmatprep.subr.mxu0 0.0
    %113 = vmatpush1.msra.mxu0 %v101
    %114 = vmatprep.subr.mxu0 0.0
    %115 = vmatpush1.msra.mxu0 0.0
    %116 = vmatprep.subr.mxu0 0.0
    %117 = vmatpush1.msra.mxu0 0.0
    %118 = vmatprep.subr.mxu0 0.0
    %119 = vmatpush1.msra.mxu0 0.0
    %120 = vmatprep.subr.mxu0 0.0
    %121 = vmatpush1.msra.mxu0 0.0
    %122 = vmatprep.subr.mxu0 0.0
    %123 = vmatpush1.msra.mxu0 0.0
    %124 = vmatprep.subr.mxu0 0.0
    %125 = vmatpush1.msra.mxu0 0.0
    %126 = vmatprep.subr.mxu0 0.0
    %127 = vmatpush1.msra.mxu0 0.0
    %128 = vmatprep.subr.mxu0 0.0
    %129 = vmatpush1.msra.mxu0 0.0
    %130 = vmatprep.subr.mxu0 0.0
    %131 = vmatpush1.msra.mxu0 0.0
    %132 = vmatprep.subr.mxu0 0.0
    %133 = vmatpush1.msra.mxu0 0.0
    %134 = vmatprep.subr.mxu0 0.0
    %135 = vmatpush1.msra.mxu0 0.0
    %136 = vmatprep.subr.mxu0 0.0
    %137 = vmatpush1.msra.mxu0 0.0
    %138 = vmatprep.subr.mxu0 0.0
    %139 = vmatpush1.msra.mxu0 0.0
    %140 = vmatprep.subr.mxu0 0.0
    %141 = vmatpush1.msra.mxu0 0.0
    %142 = vmatprep.subr.mxu0 0.0
    %143 = vmatpush1.msra.mxu0 0.0
    %144 = vmatprep.subr.mxu0 0.0
    %145 = vmatpush1.msra.mxu0 0.0
    %146 = vmatprep.subr.mxu0 0.0
    %147 = vmatpush1.msra.mxu0 0.0
    %148 = vmatprep.subr.mxu0 0.0
    %149 = vmatpush1.msra.mxu0 0.0
    %150 = vmatprep.subr.mxu0 0.0
    %151 = vmatpush1.msra.mxu0 0.0
    %152 = vmatprep.subr.mxu0 0.0
    %153 = vmatpush1.msra.mxu0 0.0
    %154 = vmatprep.subr.mxu0 0.0
    %155 = vmatpush1.msra.mxu0 0.0
    %156 = vmatprep.subr.mxu0 0.0
    %157 = vmatpush1.msra.mxu0 0.0
    %158 = vmatprep.subr.mxu0 0.0
    %159 = vmatpush1.msra.mxu0 0.0
    %160 = vmatprep.subr.mxu0 0.0
    %161 = vmatpush1.msra.mxu0 0.0
    %162 = vmatprep.subr.mxu0 0.0
    %163 = vmatpush1.msra.mxu0 0.0
    %164 = vmatprep.subr.mxu0 0.0
    %165 = vmatpush1.msra.mxu0 0.0
    %166 = vmatprep.subr.mxu0 0.0
    %167 = vmatpush1.msra.mxu0 0.0
    %168 = vmatprep.subr.mxu0 0.0
    %169 = vmatpush1.msra.mxu0 0.0
    %170 = vmatprep.mubr.f32.mxu0 0.0
    %171 = vmatmul.mubr.f32.gmra.mrb[0].mxu0 %v104
    %v172 = vpop.f32.mrb[0].mxu0
    %v173 = vadd.f32 0.0, %v172
    %v174 = vpop.f32.mrb[0].mxu0
    %175 = vdwg.mxu0
    %v178 = vunpack.c.l.s4 1966171168
    %v179 = vunpack.c.0.s8 %v178
    %v180 = vlaneseq
    %v181 = vshrl.u32 %v180, 7
    %v182 = vsub.s32 %v179, %v181
    %v183 = vrot.slane %v173, %v182
    %v184 = vcombine.high %v183, %v183
    %v186 = vunpack.c.l.s4 1966171168
    %v187 = vunpack.c.0.s8 %v186
    %v188 = vlaneseq
    %v189 = vshrl.u32 %v188, 7
    %v190 = vsub.s32 %v187, %v189
    %v191 = vrot.slane %v183, %v190
    %v193 = vunpack.c.l.s4 1966171168
    %v194 = vunpack.c.0.s8 %v193
    %v195 = vlaneseq
    %v196 = vshrl.u32 %v195, 7
    %v197 = vsub.s32 %v194, %v196
    %v198 = vrot.slane %v184, %v197
    %v199 = vsel %vm102, %v191, 0
    %v202 = vsel %vm102, %v94, 0
    %204 = vmatprep.subr.mxu0 0.0
    %205 = vmatpush1.xpose.msra.mxu0 %v202
    %206 = vmatprep.subr.mxu0 0.0
    %207 = vmatpush1.xpose.msra.mxu0 0.0
    %208 = vmatprep.subr.mxu0 0.0
    %209 = vmatpush1.xpose.msra.mxu0 0.0
    %210 = vmatprep.subr.mxu0 0.0
    %211 = vmatpush1.xpose.msra.mxu0 0.0
    %212 = vmatprep.subr.mxu0 0.0
    %213 = vmatpush1.xpose.msra.mxu0 0.0
    %214 = vmatprep.subr.mxu0 0.0
    %215 = vmatpush1.xpose.msra.mxu0 0.0
    %216 = vmatprep.subr.mxu0 0.0
    %217 = vmatpush1.xpose.msra.mxu0 0.0
    %218 = vmatprep.subr.mxu0 0.0
    %219 = vmatpush1.xpose.msra.mxu0 0.0
    %220 = vmatprep.subr.mxu0 0.0
    %221 = vmatpush1.xpose.msra.mxu0 0.0
    %222 = vmatprep.subr.mxu0 0.0
    %223 = vmatpush1.xpose.msra.mxu0 0.0
    %224 = vmatprep.subr.mxu0 0.0
    %225 = vmatpush1.xpose.msra.mxu0 0.0
    %226 = vmatprep.subr.mxu0 0.0
    %227 = vmatpush1.xpose.msra.mxu0 0.0
    %228 = vmatprep.subr.mxu0 0.0
    %229 = vmatpush1.xpose.msra.mxu0 0.0
    %230 = vmatprep.subr.mxu0 0.0
    %231 = vmatpush1.xpose.msra.mxu0 0.0
    %232 = vmatprep.subr.mxu0 0.0
    %233 = vmatpush1.xpose.msra.mxu0 0.0
    %234 = vmatprep.subr.mxu0 0.0
    %235 = vmatpush1.xpose.msra.mxu0 0.0
    %236 = vmatprep.subr.mxu0 0.0
    %237 = vmatpush1.xpose.msra.mxu0 0.0
    %238 = vmatprep.subr.mxu0 0.0
    %239 = vmatpush1.xpose.msra.mxu0 0.0
    %240 = vmatprep.subr.mxu0 0.0
    %241 = vmatpush1.xpose.msra.mxu0 0.0
    %242 = vmatprep.subr.mxu0 0.0
    %243 = vmatpush1.xpose.msra.mxu0 0.0
    %244 = vmatprep.subr.mxu0 0.0
    %245 = vmatpush1.xpose.msra.mxu0 0.0
    %246 = vmatprep.subr.mxu0 0.0
    %247 = vmatpush1.xpose.msra.mxu0 0.0
    %248 = vmatprep.subr.mxu0 0.0
    %249 = vmatpush1.xpose.msra.mxu0 0.0
    %250 = vmatprep.subr.mxu0 0.0
    %251 = vmatpush1.xpose.msra.mxu0 0.0
    %252 = vmatprep.subr.mxu0 0.0
    %253 = vmatpush1.xpose.msra.mxu0 0.0
    %254 = vmatprep.subr.mxu0 0.0
    %255 = vmatpush1.xpose.msra.mxu0 0.0
    %256 = vmatprep.subr.mxu0 0.0
    %257 = vmatpush1.xpose.msra.mxu0 0.0
    %258 = vmatprep.subr.mxu0 0.0
    %259 = vmatpush1.xpose.msra.mxu0 0.0
    %260 = vmatprep.subr.mxu0 0.0
    %261 = vmatpush1.xpose.msra.mxu0 0.0
    %262 = vmatprep.subr.mxu0 0.0
    %263 = vmatpush1.xpose.msra.mxu0 0.0
    %264 = vmatprep.subr.mxu0 0.0
    %265 = vmatpush1.xpose.msra.mxu0 0.0
    %266 = vmatprep.subr.mxu0 0.0
    %267 = vmatpush1.xpose.msra.mxu0 0.0
    %268 = vmatprep.mubr.f32.mxu0 0.0
    %269 = vmatmul.mubr.f32.gmra.mrb[0].mxu0 %v199
    %v270 = vpop.f32.mrb[0].mxu0
    %v271 = vadd.f32 0.0, %v270
    %v272 = vpop.f32.mrb[0].mxu0
    %273 = vdwg.mxu0
    %v274 = vsel %vm102, %v198, 0
    %v277 = vsel %vm102, %v95, 0
    %279 = vmatprep.subr.mxu0 0.0
    %280 = vmatpush1.xpose.msra.mxu0 %v277
    %281 = vmatprep.subr.mxu0 0.0
    %282 = vmatpush1.xpose.msra.mxu0 0.0
    %283 = vmatprep.subr.mxu0 0.0
    %284 = vmatpush1.xpose.msra.mxu0 0.0
    %285 = vmatprep.subr.mxu0 0.0
    %286 = vmatpush1.xpose.msra.mxu0 0.0
    %287 = vmatprep.subr.mxu0 0.0
    %288 = vmatpush1.xpose.msra.mxu0 0.0
    %289 = vmatprep.subr.mxu0 0.0
    %290 = vmatpush1.xpose.msra.mxu0 0.0
    %291 = vmatprep.subr.mxu0 0.0
    %292 = vmatpush1.xpose.msra.mxu0 0.0
    %293 = vmatprep.subr.mxu0 0.0
    %294 = vmatpush1.xpose.msra.mxu0 0.0
    %295 = vmatprep.subr.mxu0 0.0
    %296 = vmatpush1.xpose.msra.mxu0 0.0
    %297 = vmatprep.subr.mxu0 0.0
    %298 = vmatpush1.xpose.msra.mxu0 0.0
    %299 = vmatprep.subr.mxu0 0.0
    %300 = vmatpush1.xpose.msra.mxu0 0.0
    %301 = vmatprep.subr.mxu0 0.0
    %302 = vmatpush1.xpose.msra.mxu0 0.0
    %303 = vmatprep.subr.mxu0 0.0
    %304 = vmatpush1.xpose.msra.mxu0 0.0
    %305 = vmatprep.subr.mxu0 0.0
    %306 = vmatpush1.xpose.msra.mxu0 0.0
    %307 = vmatprep.subr.mxu0 0.0
    %308 = vmatpush1.xpose.msra.mxu0 0.0
    %309 = vmatprep.subr.mxu0 0.0
    %310 = vmatpush1.xpose.msra.mxu0 0.0
    %311 = vmatprep.subr.mxu0 0.0
    %312 = vmatpush1.xpose.msra.mxu0 0.0
    %313 = vmatprep.subr.mxu0 0.0
    %314 = vmatpush1.xpose.msra.mxu0 0.0
    %315 = vmatprep.subr.mxu0 0.0
    %316 = vmatpush1.xpose.msra.mxu0 0.0
    %317 = vmatprep.subr.mxu0 0.0
    %318 = vmatpush1.xpose.msra.mxu0 0.0
    %319 = vmatprep.subr.mxu0 0.0
    %320 = vmatpush1.xpose.msra.mxu0 0.0
    %321 = vmatprep.subr.mxu0 0.0
    %322 = vmatpush1.xpose.msra.mxu0 0.0
    %323 = vmatprep.subr.mxu0 0.0
    %324 = vmatpush1.xpose.msra.mxu0 0.0
    %325 = vmatprep.subr.mxu0 0.0
    %326 = vmatpush1.xpose.msra.mxu0 0.0
    %327 = vmatprep.subr.mxu0 0.0
    %328 = vmatpush1.xpose.msra.mxu0 0.0
    %329 = vmatprep.subr.mxu0 0.0
    %330 = vmatpush1.xpose.msra.mxu0 0.0
    %331 = vmatprep.subr.mxu0 0.0
    %332 = vmatpush1.xpose.msra.mxu0 0.0
    %333 = vmatprep.subr.mxu0 0.0
    %334 = vmatpush1.xpose.msra.mxu0 0.0
    %335 = vmatprep.subr.mxu0 0.0
    %336 = vmatpush1.xpose.msra.mxu0 0.0
    %337 = vmatprep.subr.mxu0 0.0
    %338 = vmatpush1.xpose.msra.mxu0 0.0
    %339 = vmatprep.subr.mxu0 0.0
    %340 = vmatpush1.xpose.msra.mxu0 0.0
    %341 = vmatprep.subr.mxu0 0.0
    %342 = vmatpush1.xpose.msra.mxu0 0.0
    %343 = vmatprep.mubr.f32.mxu0 0.0
    %344 = vmatmul.mubr.f32.gmra.mrb[0].mxu0 %v274
    %v345 = vpop.f32.mrb[0].mxu0
    %v346 = vadd.f32 0.0, %v345
    %v347 = vpop.f32.mrb[0].mxu0
    %348 = vdwg.mxu0
    %vm349 = vcmask 57344
    %v350 = vsel %vm349, %v271, -inf
    %351 = vmax.xlane.f32.xlu0 %v350
    %v352 = vpop.xlane.xlu0 %351
    %v353 = vsel %vm349, %v346, -inf
    %354 = vmax.xlane.f32.xlu0 %v353
    %v355 = vpop.xlane.xlu0 %354
    %v356 = vsub.f32 %v271, %v352
    %v357 = vsub.f32 %v346, %v355
    %v358 = vmul.f32 %v356, 1.442695
    %v359 = vpow.pop %v358
    %v360 = vmul.f32 %v357, 1.442695
    %v361 = vpow.pop %v360
    %vm362 = vcmp.gt.f32.partialorder %v96, 0.5
    %vm363 = vcmp.gt.f32.partialorder %v97, 0.5
    %v364 = vsel %vm362, %v359, 0.0
    %v365 = vsel %vm363, %v361, 0.0
    %v366 = vsel %vm349, %v364, 0.0
    %367 = vadd.xlane.f32.xlu0 %v366
    %v368 = vpop.xlane.xlu0 %367
    %v369 = vsel %vm349, %v365, 0.0
    %370 = vadd.xlane.f32.xlu0 %v369
    %v371 = vpop.xlane.xlu0 %370
    %v372 = vrcp.pop %v368
    %v373 = vrcp.pop %v371
    %v374 = vmul.f32 %v364, %v372
    %v375 = vmul.f32 %v365, %v373
    %376 = vst.msk [vmem:[#allocation12] sm:$0x1] %vm349, %v374
    %377 = vst.msk [vmem:[#allocation12 + $0x1] sm:$0x1] %vm349, %v375
    %vm378 = vcmask 64512
    %v380 = vsel %vm378, %v364, 0
    %382 = vmatprep.subr.mxu0 0.0
    %383 = vmatpush1.msra.mxu0 %v94
    %384 = vmatprep.subr.mxu0 0.0
    %385 = vmatpush1.msra.mxu0 0.0
    %386 = vmatprep.subr.mxu0 0.0
    %387 = vmatpush1.msra.mxu0 0.0
    %388 = vmatprep.subr.mxu0 0.0
    %389 = vmatpush1.msra.mxu0 0.0
    %390 = vmatprep.subr.mxu0 0.0
    %391 = vmatpush1.msra.mxu0 0.0
    %392 = vmatprep.subr.mxu0 0.0
    %393 = vmatpush1.msra.mxu0 0.0
    %394 = vmatprep.subr.mxu0 0.0
    %395 = vmatpush1.msra.mxu0 0.0
    %396 = vmatprep.subr.mxu0 0.0
    %397 = vmatpush1.msra.mxu0 0.0
    %398 = vmatprep.subr.mxu0 0.0
    %399 = vmatpush1.msra.mxu0 0.0
    %400 = vmatprep.subr.mxu0 0.0
    %401 = vmatpush1.msra.mxu0 0.0
    %402 = vmatprep.subr.mxu0 0.0
    %403 = vmatpush1.msra.mxu0 0.0
    %404 = vmatprep.subr.mxu0 0.0
    %405 = vmatpush1.msra.mxu0 0.0
    %406 = vmatprep.subr.mxu0 0.0
    %407 = vmatpush1.msra.mxu0 0.0
    %408 = vmatprep.subr.mxu0 0.0
    %409 = vmatpush1.msra.mxu0 0.0
    %410 = vmatprep.subr.mxu0 0.0
    %411 = vmatpush1.msra.mxu0 0.0
    %412 = vmatprep.subr.mxu0 0.0
    %413 = vmatpush1.msra.mxu0 0.0
    %414 = vmatprep.subr.mxu0 0.0
    %415 = vmatpush1.msra.mxu0 0.0
    %416 = vmatprep.subr.mxu0 0.0
    %417 = vmatpush1.msra.mxu0 0.0
    %418 = vmatprep.subr.mxu0 0.0
    %419 = vmatpush1.msra.mxu0 0.0
    %420 = vmatprep.subr.mxu0 0.0
    %421 = vmatpush1.msra.mxu0 0.0
    %422 = vmatprep.subr.mxu0 0.0
    %423 = vmatpush1.msra.mxu0 0.0
    %424 = vmatprep.subr.mxu0 0.0
    %425 = vmatpush1.msra.mxu0 0.0
    %426 = vmatprep.subr.mxu0 0.0
    %427 = vmatpush1.msra.mxu0 0.0
    %428 = vmatprep.subr.mxu0 0.0
    %429 = vmatpush1.msra.mxu0 0.0
    %430 = vmatprep.subr.mxu0 0.0
    %431 = vmatpush1.msra.mxu0 0.0
    %432 = vmatprep.subr.mxu0 0.0
    %433 = vmatpush1.msra.mxu0 0.0
    %434 = vmatprep.subr.mxu0 0.0
    %435 = vmatpush1.msra.mxu0 0.0
    %436 = vmatprep.subr.mxu0 0.0
    %437 = vmatpush1.msra.mxu0 0.0
    %438 = vmatprep.subr.mxu0 0.0
    %439 = vmatpush1.msra.mxu0 0.0
    %440 = vmatprep.subr.mxu0 0.0
    %441 = vmatpush1.msra.mxu0 0.0
    %442 = vmatprep.subr.mxu0 0.0
    %443 = vmatpush1.msra.mxu0 0.0
    %444 = vmatprep.subr.mxu0 0.0
    %445 = vmatpush1.msra.mxu0 0.0
    %446 = vmatprep.mubr.f32.mxu0 0.0
    %447 = vmatmul.mubr.f32.gmra.mrb[0].mxu0 %v380
    %v448 = vpop.f32.mrb[0].mxu0
    %v449 = vadd.f32 0.0, %v448
    %v450 = vpop.f32.mrb[0].mxu0
    %451 = vdwg.mxu0
    %v453 = vsel %vm378, %v365, 0
    %455 = vmatprep.subr.mxu0 0.0
    %456 = vmatpush1.msra.mxu0 %v95
    %457 = vmatprep.subr.mxu0 0.0
    %458 = vmatpush1.msra.mxu0 0.0
    %459 = vmatprep.subr.mxu0 0.0
    %460 = vmatpush1.msra.mxu0 0.0
    %461 = vmatprep.subr.mxu0 0.0
    %462 = vmatpush1.msra.mxu0 0.0
    %463 = vmatprep.subr.mxu0 0.0
    %464 = vmatpush1.msra.mxu0 0.0
    %465 = vmatprep.subr.mxu0 0.0
    %466 = vmatpush1.msra.mxu0 0.0
    %467 = vmatprep.subr.mxu0 0.0
    %468 = vmatpush1.msra.mxu0 0.0
    %469 = vmatprep.subr.mxu0 0.0
    %470 = vmatpush1.msra.mxu0 0.0
    %471 = vmatprep.subr.mxu0 0.0
    %472 = vmatpush1.msra.mxu0 0.0
    %473 = vmatprep.subr.mxu0 0.0
    %474 = vmatpush1.msra.mxu0 0.0
    %475 = vmatprep.subr.mxu0 0.0
    %476 = vmatpush1.msra.mxu0 0.0
    %477 = vmatprep.subr.mxu0 0.0
    %478 = vmatpush1.msra.mxu0 0.0
    %479 = vmatprep.subr.mxu0 0.0
    %480 = vmatpush1.msra.mxu0 0.0
    %481 = vmatprep.subr.mxu0 0.0
    %482 = vmatpush1.msra.mxu0 0.0
    %483 = vmatprep.subr.mxu0 0.0
    %484 = vmatpush1.msra.mxu0 0.0
    %485 = vmatprep.subr.mxu0 0.0
    %486 = vmatpush1.msra.mxu0 0.0
    %487 = vmatprep.subr.mxu0 0.0
    %488 = vmatpush1.msra.mxu0 0.0
    %489 = vmatprep.subr.mxu0 0.0
    %490 = vmatpush1.msra.mxu0 0.0
    %491 = vmatprep.subr.mxu0 0.0
    %492 = vmatpush1.msra.mxu0 0.0
    %493 = vmatprep.subr.mxu0 0.0
    %494 = vmatpush1.msra.mxu0 0.0
    %495 = vmatprep.subr.mxu0 0.0
    %496 = vmatpush1.msra.mxu0 0.0
    %497 = vmatprep.subr.mxu0 0.0
    %498 = vmatpush1.msra.mxu0 0.0
    %499 = vmatprep.subr.mxu0 0.0
    %500 = vmatpush1.msra.mxu0 0.0
    %501 = vmatprep.subr.mxu0 0.0
    %502 = vmatpush1.msra.mxu0 0.0
    %503 = vmatprep.subr.mxu0 0.0
    %504 = vmatpush1.msra.mxu0 0.0
    %505 = vmatprep.subr.mxu0 0.0
    %506 = vmatpush1.msra.mxu0 0.0
    %507 = vmatprep.subr.mxu0 0.0
    %508 = vmatpush1.msra.mxu0 0.0
    %509 = vmatprep.subr.mxu0 0.0
    %510 = vmatpush1.msra.mxu0 0.0
    %511 = vmatprep.subr.mxu0 0.0
    %512 = vmatpush1.msra.mxu0 0.0
    %513 = vmatprep.subr.mxu0 0.0
    %514 = vmatpush1.msra.mxu0 0.0
    %515 = vmatprep.subr.mxu0 0.0
    %516 = vmatpush1.msra.mxu0 0.0
    %517 = vmatprep.subr.mxu0 0.0
    %518 = vmatpush1.msra.mxu0 0.0
    %519 = vmatprep.mubr.f32.mxu0 0.0
    %520 = vmatmul.mubr.f32.gmra.mrb[0].mxu0 %v453
    %v521 = vpop.f32.mrb[0].mxu0
    %v522 = vadd.f32 0.0, %v521
    %v523 = vpop.f32.mrb[0].mxu0
    %524 = vdwg.mxu0
    %v525 = vmul.f32 %v449, %v372
    %v526 = vmul.f32 %v522, %v373
    %v527 = vld [vmem:[#allocation8] sm:$0xff]
    %v528 = vld [vmem:[#allocation8 + $0x8] sm:$0xff]
    %v529 = vld [vmem:[#allocation8 + $0x10] sm:$0xff]
    %v530 = vld [vmem:[#allocation8 + $0x18] sm:$0xff]
    %v531 = vld [vmem:[#allocation10] sm:$0xff]
    %v532 = vld [vmem:[#allocation10 + $0x8] sm:$0xff]
    %v533 = vld [vmem:[#allocation10 + $0x10] sm:$0xff]
    %v534 = vld [vmem:[#allocation10 + $0x18] sm:$0xff]
    %535 = vmatprep.subr.mxu0 0.0
    %536 = vmatpush1.msra.mxu0 %v531
    %537 = vmatprep.subr.mxu0 0.0
    %538 = vmatpush1.msra.mxu0 %v532
    %539 = vmatprep.subr.mxu0 0.0
    %540 = vmatpush1.msra.mxu0 %v533
    %541 = vmatprep.subr.mxu0 0.0
    %542 = vmatpush1.msra.mxu0 %v534
    %543 = vmatprep.subr.mxu0 0.0
    %544 = vmatpush1.msra.mxu0 0.0
    %545 = vmatprep.subr.mxu0 0.0
    %546 = vmatpush1.msra.mxu0 0.0
    %547 = vmatprep.subr.mxu0 0.0
    %548 = vmatpush1.msra.mxu0 0.0
    %549 = vmatprep.subr.mxu0 0.0
    %550 = vmatpush1.msra.mxu0 0.0
    %551 = vmatprep.subr.mxu0 0.0
    %552 = vmatpush1.msra.mxu0 0.0
    %553 = vmatprep.subr.mxu0 0.0
    %554 = vmatpush1.msra.mxu0 0.0
    %555 = vmatprep.subr.mxu0 0.0
    %556 = vmatpush1.msra.mxu0 0.0
    %557 = vmatprep.subr.mxu0 0.0
    %558 = vmatpush1.msra.mxu0 0.0
    %559 = vmatprep.subr.mxu0 0.0
    %560 = vmatpush1.msra.mxu0 0.0
    %561 = vmatprep.subr.mxu0 0.0
    %562 = vmatpush1.msra.mxu0 0.0
    %563 = vmatprep.subr.mxu0 0.0
    %564 = vmatpush1.msra.mxu0 0.0
    %565 = vmatprep.subr.mxu0 0.0
    %566 = vmatpush1.msra.mxu0 0.0
    %567 = vmatprep.subr.mxu0 0.0
    %568 = vmatpush1.msra.mxu0 0.0
    %569 = vmatprep.subr.mxu0 0.0
    %570 = vmatpush1.msra.mxu0 0.0
    %571 = vmatprep.subr.mxu0 0.0
    %572 = vmatpush1.msra.mxu0 0.0
    %573 = vmatprep.subr.mxu0 0.0
    %574 = vmatpush1.msra.mxu0 0.0
    %575 = vmatprep.subr.mxu0 0.0
    %576 = vmatpush1.msra.mxu0 0.0
    %577 = vmatprep.subr.mxu0 0.0
    %578 = vmatpush1.msra.mxu0 0.0
    %579 = vmatprep.subr.mxu0 0.0
    %580 = vmatpush1.msra.mxu0 0.0
    %581 = vmatprep.subr.mxu0 0.0
    %582 = vmatpush1.msra.mxu0 0.0
    %583 = vmatprep.subr.mxu0 0.0
    %584 = vmatpush1.msra.mxu0 0.0
    %585 = vmatprep.subr.mxu0 0.0
    %586 = vmatpush1.msra.mxu0 0.0
    %587 = vmatprep.subr.mxu0 0.0
    %588 = vmatpush1.msra.mxu0 0.0
    %589 = vmatprep.subr.mxu0 0.0
    %590 = vmatpush1.msra.mxu0 0.0
    %591 = vmatprep.subr.mxu0 0.0
    %592 = vmatpush1.msra.mxu0 0.0
    %593 = vmatprep.subr.mxu0 0.0
    %594 = vmatpush1.msra.mxu0 0.0
    %595 = vmatprep.subr.mxu0 0.0
    %596 = vmatpush1.msra.mxu0 0.0
    %597 = vmatprep.subr.mxu0 0.0
    %598 = vmatpush1.msra.mxu0 0.0
    %599 = vmatprep.mubr.f32.mxu0 0.0
    %600 = vmatmul.mubr.f32.gmra.mrb[0].mxu0 %v104
    %v601 = vpop.f32.mrb[0].mxu0
    %v602 = vadd.f32 0.0, %v601
    %v603 = vpop.f32.mrb[0].mxu0
    %604 = vdwg.mxu0
    %v607 = vrot.slane %v526, 7
    %vm608 = vcmask 1041409
    %v609 = vsel %vm608, %v607, %v525
    %v610 = vsel %vm102, %v609, 0
    %612 = vmatprep.subr.mxu0 0.0
    %613 = vmatpush1.msra.mxu0 %v527
    %614 = vmatprep.subr.mxu0 0.0
    %615 = vmatpush1.msra.mxu0 %v528
    %616 = vmatprep.subr.mxu0 0.0
    %617 = vmatpush1.msra.mxu0 %v529
    %618 = vmatprep.subr.mxu0 0.0
    %619 = vmatpush1.msra.mxu0 %v530
    %620 = vmatprep.subr.mxu0 0.0
    %621 = vmatpush1.msra.mxu0 0.0
    %622 = vmatprep.subr.mxu0 0.0
    %623 = vmatpush1.msra.mxu0 0.0
    %624 = vmatprep.subr.mxu0 0.0
    %625 = vmatpush1.msra.mxu0 0.0
    %626 = vmatprep.subr.mxu0 0.0
    %627 = vmatpush1.msra.mxu0 0.0
    %628 = vmatprep.subr.mxu0 0.0
    %629 = vmatpush1.msra.mxu0 0.0
    %630 = vmatprep.subr.mxu0 0.0
    %631 = vmatpush1.msra.mxu0 0.0
    %632 = vmatprep.subr.mxu0 0.0
    %633 = vmatpush1.msra.mxu0 0.0
    %634 = vmatprep.subr.mxu0 0.0
    %635 = vmatpush1.msra.mxu0 0.0
    %636 = vmatprep.subr.mxu0 0.0
    %637 = vmatpush1.msra.mxu0 0.0
    %638 = vmatprep.subr.mxu0 0.0
    %639 = vmatpush1.msra.mxu0 0.0
    %640 = vmatprep.subr.mxu0 0.0
    %641 = vmatpush1.msra.mxu0 0.0
    %642 = vmatprep.subr.mxu0 0.0
    %643 = vmatpush1.msra.mxu0 0.0
    %644 = vmatprep.subr.mxu0 0.0
    %645 = vmatpush1.msra.mxu0 0.0
    %646 = vmatprep.subr.mxu0 0.0
    %647 = vmatpush1.msra.mxu0 0.0
    %648 = vmatprep.subr.mxu0 0.0
    %649 = vmatpush1.msra.mxu0 0.0
    %650 = vmatprep.subr.mxu0 0.0
    %651 = vmatpush1.msra.mxu0 0.0
    %652 = vmatprep.subr.mxu0 0.0
    %653 = vmatpush1.msra.mxu0 0.0
    %654 = vmatprep.subr.mxu0 0.0
    %655 = vmatpush1.msra.mxu0 0.0
    %656 = vmatprep.subr.mxu0 0.0
    %657 = vmatpush1.msra.mxu0 0.0
    %658 = vmatprep.subr.mxu0 0.0
    %659 = vmatpush1.msra.mxu0 0.0
    %660 = vmatprep.subr.mxu0 0.0
    %661 = vmatpush1.msra.mxu0 0.0
    %662 = vmatprep.subr.mxu0 0.0
    %663 = vmatpush1.msra.mxu0 0.0
    %664 = vmatprep.subr.mxu0 0.0
    %665 = vmatpush1.msra.mxu0 0.0
    %666 = vmatprep.subr.mxu0 0.0
    %667 = vmatpush1.msra.mxu0 0.0
    %668 = vmatprep.subr.mxu0 0.0
    %669 = vmatpush1.msra.mxu0 0.0
    %670 = vmatprep.subr.mxu0 0.0
    %671 = vmatpush1.msra.mxu0 0.0
    %672 = vmatprep.subr.mxu0 0.0
    %673 = vmatpush1.msra.mxu0 0.0
    %674 = vmatprep.subr.mxu0 0.0
    %675 = vmatpush1.msra.mxu0 0.0
    %676 = vmatprep.mubr.f32.mxu0 0.0
    %677 = vmatmul.mubr.f32.gmra.mrb[0].mxu0 %v610
    %v678 = vpop.f32.mrb[0].mxu0
    %v679 = vadd.f32 %v602, %v678
    %v680 = vpop.f32.mrb[0].mxu0
    %681 = vdwg.mxu0
    %v682 = vtanh.pop %v679
    %vm683 = vcmask 254976
    %684 = vst.msk [vmem:[#allocation11] sm:$0x3] %vm683, %v682
    // Predicated region
    $region46: #{tpu_custom_call.1} parent=1 // pred_check
      _
    $region47: #{tpu_custom_call.1} parent=1 // pred_check_branch
      %686 = sbr.rel (0) target = $region49
    $region48: #{tpu_custom_call.1} parent=1 // pred_region
      %s688 = ssub.s32 32, 32
      %689 = vsyncadd [#allocation4], %s688
      %s691 = sshll.u32 [#allocation11], 4
      %s692 = int_to_ptr.vmem [resolvable:$true] %s691
      %694 = dma.vmem_to_hbm [thread:$0]  %s692, 32, %s6, [#allocation4]
    $region49: #{tpu_custom_call.1} parent=1 // pred_fallthru
      _
    // Predicated region
    $region50: #{tpu_custom_call.1} parent=1 // pred_check
      _
    $region51: #{tpu_custom_call.1} parent=1 // pred_check_branch
      %696 = sbr.rel (0) target = $region53
    $region52: #{tpu_custom_call.1} parent=1 // pred_region
      %s698 = ssub.s32 32, 32
      %699 = vsyncadd [#allocation13], %s698
      %s700 = sshll.u32 [#allocation12], 4
      %s701 = int_to_ptr.vmem [resolvable:$true] %s700
      %706 = dma.vmem_to_hbm [thread:$0]  %s701, 32, %s7, [#allocation13], 16, 16, 1
    $region53: #{tpu_custom_call.1} parent=1 // pred_fallthru
      _
    // Predicated region
    $region54: #{tpu_custom_call.1} parent=1 // pred_check
      _
    $region55: #{tpu_custom_call.1} parent=1 // pred_check_branch
      %708 = sbr.rel (0) target = $region57
    $region56: #{tpu_custom_call.1} parent=1 // pred_region
      %709 = dma.done [#allocation4], 32
    $region57: #{tpu_custom_call.1} parent=1 // pred_fallthru
      _
    // Predicated region
    $region58: #{tpu_custom_call.1} parent=1 // pred_check
      _
    $region59: #{tpu_custom_call.1} parent=1 // pred_check_branch
      %711 = sbr.rel (0) target = $region61
    $region60: #{tpu_custom_call.1} parent=1 // pred_region
      %712 = dma.done [#allocation13], 32
    $region61: #{tpu_custom_call.1} parent=1 // pred_fallthru
      _
    %713 = vsyncpa [#allocation3], 1
    %714 = vsyncpa [#allocation6], 1
    %715 = vsyncpa [#allocation9], 1
    %716 = vsyncpa [#allocation4], 1
    %717 = vsyncpa [#allocation13], 1

</llo_original>
